<compile_context>
chip_gen: v7x
topology: tpu7x:2x2x1
jax: 0.10.0
libtpu: 0.0.40
codegen_flags: <defaults>
</compile_context>

<pallas_src>
import math
import functools

import jax
import jax.numpy as jnp
from jax.experimental import pallas as pl
from jax.experimental.pallas import tpu as pltpu


# ---------------------------------------------------------------------------
# PE table: matches the torch buffer `pe` before unsqueeze/transpose: (L, D).
# ---------------------------------------------------------------------------
def build_pe_table(max_len: int, d_model: int) -> jnp.ndarray:
    position = jnp.arange(0, max_len, dtype=jnp.float32)[:, None]          # (L, 1)
    div_term = jnp.exp(jnp.arange(0, d_model, 2, dtype=jnp.float32)
                       * (-math.log(10000.0) / d_model))                   # (ceil(D/2),)
    angles = position * div_term
    pe = jnp.zeros((max_len, d_model), dtype=jnp.float32)
    pe = pe.at[:, 0::2].set(jnp.sin(angles))
    if d_model % 2 == 0:
        pe = pe.at[:, 1::2].set(jnp.cos(angles))
    else:
        pe = pe.at[:, 1::2].set(jnp.cos(angles)[:, :-1])
    return pe


# ---------------------------------------------------------------------------
# Counter-based PRNG (murmur3 finalizer on int32).  Pure jnp ops only, so it
# lowers in Mosaic AND in interpret mode (unlike pltpu.prng_* primitives).
# ---------------------------------------------------------------------------
def _as_i32(v: int) -> int:
    v &= 0xFFFFFFFF
    return v - (1 << 32) if v >= (1 << 31) else v


_GOLD = _as_i32(0x9E3779B9)
_C1 = _as_i32(0x85EBCA6B)
_C2 = _as_i32(0xC2B2AE35)


def _lsr32(x, k):
    # logical (unsigned) right shift for int32 values
    return (x >> k) & jnp.int32((1 << (32 - k)) - 1)


def _fmix32(h):
    h = h ^ _lsr32(h, 16)
    h = h * jnp.int32(_C1)
    h = h ^ _lsr32(h, 13)
    h = h * jnp.int32(_C2)
    h = h ^ _lsr32(h, 16)
    return h


# ---------------------------------------------------------------------------
# Kernel
# ---------------------------------------------------------------------------
def _pe_kernel(tile_s, dropout_p, apply_dropout, pe_resident, layout, d_model,
               row_elems, seed_ref, x_ref, pe_ref, o_ref):
    # layout == "sf2": x/o are (tile_s, B*D),  pe is (*, B*D)   (flattened seq-first)
    # layout == "sf3": x/o are (tile_s, B, D), pe is (*, D)     (seq-first)
    # layout == "bf" : x/o are (B, tile_s, D), pe is (*, D)     (batch-first)
    step = pl.program_id(0)

    if pe_resident:
        start = pl.multiple_of(step * tile_s, 8)   # tile_s % 8 == 0 whenever multi-tile
        pe = pe_ref[pl.ds(start, tile_s), :]
    else:
        pe = pe_ref[...]

    x = x_ref[...]
    if layout == "sf2":
        y = x + pe
    elif layout == "sf3":
        y = x + pe[:, None, :]
    else:  # "bf"
        y = x + pe[None, :, :]

    if apply_dropout:
        shape = y.shape
        seq_axis = 1 if layout == "bf" else 0
        s_idx = jax.lax.broadcasted_iota(jnp.int32, shape, seq_axis) + step * tile_s
        if layout == "sf2":
            inner = jax.lax.broadcasted_iota(jnp.int32, shape, 1)
        elif layout == "sf3":
            inner = (jax.lax.broadcasted_iota(jnp.int32, shape, 1) * d_model
                     + jax.lax.broadcasted_iota(jnp.int32, shape, 2))
        else:  # "bf"
            inner = (jax.lax.broadcasted_iota(jnp.int32, shape, 0) * d_model
                     + jax.lax.broadcasted_iota(jnp.int32, shape, 2))
        idx = s_idx * jnp.int32(row_elems) + inner        # unique per element
        h = _fmix32(idx ^ (seed_ref[0] * jnp.int32(_GOLD)))
        bits31 = h & jnp.int32(0x7FFFFFFF)
        thr = jnp.int32(min(int(round(dropout_p * float(1 << 31))), (1 << 31) - 1))
        keep = bits31 >= thr                               # keep prob = 1 - p
        scale = jnp.asarray(1.0 / (1.0 - dropout_p), dtype=y.dtype)
        y = jnp.where(keep, y * scale, jnp.zeros_like(y))

    o_ref[...] = y


# ---------------------------------------------------------------------------
# Wrapper
# ---------------------------------------------------------------------------
def _vmem_capacity_bytes():
    try:
        return int(pltpu.get_tpu_info().vmem_capacity_bytes)
    except Exception:
        return 64 << 20          # conservative default (v7x per-TensorCore VMEM)


def _round_up8(n):
    return -(-int(n) // 8) * 8


def positional_encoding(x, pe_table, *, dropout_p=0.1, training=False,
                        batch_first=False, seed=0, tile_s=None,
                        target_block_bytes=8 << 20,
                        pe_resident_max_bytes=4 << 20):
    """Forward pass of PositionalEncoding (add PE, then dropout in training).

    x:        (S, B, D) if batch_first=False (PyTorch default), else (B, S, D).
    pe_table: (max_len, D) float32 table from build_pe_table.
    Notes:
      * Purely HBM-bound (1 read + 1 write / element) -> pass bf16 activations
        for ~2x wall time on v5e.  The PE table is cast to x.dtype, so the add
        runs at activation precision (tiny deviation from torch's f32 add).
      * seed should vary per step/layer so dropout masks do not repeat.
    """
    if batch_first:
        B, S, D = x.shape
    else:
        S, B, D = x.shape
    assert pe_table.shape[1] == D, "d_model mismatch between x and pe_table"
    assert S <= pe_table.shape[0], "sequence length exceeds max_len of PE table"
    assert 0.0 <= dropout_p < 1.0, "dropout_p must be in [0, 1)"
    use_dropout = bool(training) and dropout_p > 0.0

    itemsize = jnp.dtype(x.dtype).itemsize
    row_elems = B * D
    row_bytes = row_elems * itemsize

    # Generation-aware working-set cap (v7x has only 64 MiB VMEM per TC).
    vmem_cap = (min(_vmem_capacity_bytes(), 128 << 20) * 3) // 4
    per_row = 4 * row_bytes + (2 * row_elems * 4 if use_dropout else 0)
    reserve = 2 * max(int(pe_resident_max_bytes), 0) + (2 << 20)

    if tile_s is None:
        cap_rows = max((vmem_cap - reserve) // per_row, 8)
        tgt_rows = max(int(target_block_bytes) // max(row_bytes, 1), 8)
        tile_s = max(8, (min(cap_rows, tgt_rows) // 8) * 8)
        if tile_s >= S:
            tile_s = S
            if S >= 16:                        # >= 2 tiles so both v7x TCs get work
                tile_s = _round_up8(-(-S // 2))
    else:
        tile_s = int(tile_s)
        if tile_s >= S:
            tile_s = S
        elif tile_s % 8 != 0:                  # keep resident-PE slices 8-aligned
            tile_s = min(_round_up8(tile_s), S)
    num_tiles = -(-S // tile_s)
    S_pad = num_tiles * tile_s

    # Layout: flatten seq-first small-batch to a lane-dense 2-D view.
    if batch_first:
        layout = "bf"
    elif B < 8 and (B * D) % 128 == 0:
        layout = "sf2"
    else:
        layout = "sf3"

    # PE slice padded to whole tiles, cast once to activation dtype.
    if pe_table.shape[0] >= S_pad:
        pe_sl = pe_table[:S_pad]
    else:
        pe_sl = jnp.pad(pe_table[:S], ((0, S_pad - S), (0, 0)))
    pe_sl = pe_sl.astype(x.dtype)
    if layout == "sf2":
        pe_sl = jnp.tile(pe_sl, (1, B))        # (S_pad, B*D) matches flattened x
    pe_cols = pe_sl.shape[1]
    pe_bytes = S_pad * pe_cols * itemsize
    pe_resident = pe_bytes <= pe_resident_max_bytes

    # Block specs.
    if layout == "bf":
        x_in = x
        x_spec = pl.BlockSpec((B, tile_s, D), lambda i, seed_ref: (0, i, 0))
        out_shape = jax.ShapeDtypeStruct(x.shape, x.dtype)
    elif layout == "sf3":
        x_in = x
        x_spec = pl.BlockSpec((tile_s, B, D), lambda i, seed_ref: (i, 0, 0))
        out_shape = jax.ShapeDtypeStruct(x.shape, x.dtype)
    else:  # "sf2"
        x_in = x.reshape(S, row_elems)
        x_spec = pl.BlockSpec((tile_s, row_elems), lambda i, seed_ref: (i, 0))
        out_shape = jax.ShapeDtypeStruct((S, row_elems), x.dtype)

    if pe_resident:
        pe_spec = pl.BlockSpec((S_pad, pe_cols), lambda i, seed_ref: (0, 0))
    else:
        pe_spec = pl.BlockSpec((tile_s, pe_cols), lambda i, seed_ref: (i, 0))

    # VMEM budget: double-buffered x/out blocks + PE buffers + dropout temps.
    blk_bytes = tile_s * row_bytes
    pe_buf = 2 * (pe_bytes if pe_resident else tile_s * pe_cols * itemsize)
    ws = 4 * blk_bytes + pe_buf + (2 << 20)
    if use_dropout:
        ws += 2 * tile_s * row_elems * 4       # i32 index + hash temporaries
    vmem_limit = int(min(max(ws, 16 << 20), max(vmem_cap, 16 << 20)))

    kernel = functools.partial(
        _pe_kernel, tile_s, float(dropout_p), use_dropout, bool(pe_resident),
        layout, D, row_elems)

    seed_arr = jnp.asarray(seed, dtype=jnp.int32).reshape((1,))

    out = pl.pallas_call(
        kernel,
        out_shape=out_shape,
        grid_spec=pltpu.PrefetchScalarGridSpec(
            num_scalar_prefetch=1,
            grid=(num_tiles,),
            in_specs=[x_spec, pe_spec],
            out_specs=x_spec,
        ),
        compiler_params=pltpu.CompilerParams(
            dimension_semantics=("parallel",),      # per-tile independent -> megacore
            vmem_limit_bytes=vmem_limit),
    )(seed_arr, x_in, pe_sl)

    if layout == "sf2":
        out = out.reshape(x.shape)
    return out


if __name__ == "__main__":
    S, B, MAX_LEN = 40, 2, 64
    key = jax.random.PRNGKey(0)

    # 1) D=64: seq-first (module default) takes the flattened lane-dense
    #    (S, B*D=128) path; auto tiling picks 2 tiles of 24 with a resident PE.
    D = 64
    x = jax.random.normal(key, (S, B, D), dtype=jnp.float32)
    pe_table = build_pe_table(MAX_LEN, D)
    ref = x + pe_table[:S][:, None, :]

    out = jax.block_until_ready(
        positional_encoding(x, pe_table, dropout_p=0.1, training=False))
    assert out.shape == x.shape
    assert jnp.allclose(out, ref, atol=1e-6), "seq-first (flattened) eval mismatch"

    # 2) batch-first layout, explicit tile_s=16 -> multi-step grid with a
    #    partial tail block.
    x_bf = jnp.transpose(x, (1, 0, 2))
    out_bf = jax.block_until_ready(
        positional_encoding(x_bf, pe_table, dropout_p=0.1, training=False,
                            batch_first=True, tile_s=16))
    assert jnp.allclose(out_bf, jnp.transpose(ref, (1, 0, 2)), atol=1e-6), \
        "batch-first eval mismatch"

    # 3) D=32: B*D=64 is not a multiple of 128 -> 3-D seq-first path.
    D2 = 32
    x2 = jax.random.normal(jax.random.PRNGKey(1), (S, B, D2), dtype=jnp.float32)
    pe_table2 = build_pe_table(MAX_LEN, D2)
    ref2 = x2 + pe_table2[:S][:, None, :]
    out2 = jax.block_until_ready(
        positional_encoding(x2, pe_table2, dropout_p=0.1, training=False))
    assert jnp.allclose(out2, ref2, atol=1e-6), "seq-first (3-D) eval mismatch"

    # 4) training-mode dropout; force the blocked (non-resident) PE path.
    # TODO(synk): dropout mask comes from an in-kernel counter-based PRNG, so it
    # cannot bit-match torch's RNG stream (semantics match: inverted dropout).
    p = 0.1
    out_tr = jax.block_until_ready(
        positional_encoding(x, pe_table, dropout_p=p, training=True, seed=123,
                            tile_s=16, pe_resident_max_bytes=0))
    keep = out_tr != 0.0
    frac_dropped = 1.0 - float(jnp.mean(keep.astype(jnp.float32)))
    assert 0.0 < frac_dropped < 0.5, f"implausible drop fraction {frac_dropped}"
    scale = jnp.float32(1.0 / (1.0 - p))
    assert jnp.allclose(jnp.where(keep, out_tr, 0.0),
                        jnp.where(keep, ref * scale, 0.0),
                        rtol=1e-6, atol=1e-6), "kept elements not scaled correctly"

    print("KERNEL_OK")
</pallas_src>

<mosaic_0001>
module attributes {stable_mosaic.version = 11 : i64} {
  func.func @_pe_kernel(%arg0: i32, %arg1: memref<1xi32, #tpu.memory_space<smem>>, %arg2: memref<24x128xf32, #tpu.memory_space<vmem>>, %arg3: memref<48x128xf32, #tpu.memory_space<vmem>>, %arg4: memref<24x128xf32, #tpu.memory_space<vmem>>) attributes {dimension_semantics = [#tpu.dimension_semantics<parallel>], iteration_bounds = array<i64: 2>, scalar_prefetch = 1 : i64, scratch_operands = 0 : i64, tpu.core_type = #tpu.core_type<tc>, window_params = [{transform_indices = @transform_0, window_bounds = array<i64: 24, 128>}, {pipeline_mode = #tpu.pipeline_mode<synchronous>, transform_indices = @transform_1, window_bounds = array<i64: 48, 128>}, {transform_indices = @transform_2, window_bounds = array<i64: 24, 128>}]} {
    %c24_i32 = arith.constant 24 : i32
    %0 = arith.muli %arg0, %c24_i32 : i32
    %1 = tpu.assume_multiple %0, 8 : i32
    %2 = arith.index_cast %1 : i32 to index
    %c0 = arith.constant 0 : index
    %3 = vector.load %arg3[%2, %c0] : memref<48x128xf32, #tpu.memory_space<vmem>>, vector<24x128xf32>
    %c0_0 = arith.constant 0 : index
    %c0_1 = arith.constant 0 : index
    %4 = vector.load %arg2[%c0_0, %c0_1] : memref<24x128xf32, #tpu.memory_space<vmem>>, vector<24x128xf32>
    %5 = arith.addf %4, %3 : vector<24x128xf32>
    %c0_2 = arith.constant 0 : index
    %c0_3 = arith.constant 0 : index
    %6 = vector.load %arg4[%c0_2, %c0_3] : memref<24x128xf32, #tpu.memory_space<vmem>>, vector<24x128xf32>
    tpu.vector_store %arg4[%c0_2, %c0_3], %5 {strides = array<i32>} : memref<24x128xf32, #tpu.memory_space<vmem>>, vector<24x128xf32>,
    return
  }
  func.func @transform_0(%arg0: i32, %arg1: memref<1xi32, #tpu.memory_space<smem>>) -> (i32, i32) {
    %c0_i32 = arith.constant 0 : i32
    %c0_i32_0 = arith.constant 0 : i32
    return %arg0, %c0_i32 : i32, i32
  }
  func.func @transform_1(%arg0: i32, %arg1: memref<1xi32, #tpu.memory_space<smem>>) -> (i32, i32) {
    %c0_i32 = arith.constant 0 : i32
    %c0_i32_0 = arith.constant 0 : i32
    %c0_i32_1 = arith.constant 0 : i32
    return %c0_i32, %c0_i32_0 : i32, i32
  }
  func.func @transform_2(%arg0: i32, %arg1: memref<1xi32, #tpu.memory_space<smem>>) -> (i32, i32) {
    %c0_i32 = arith.constant 0 : i32
    %c0_i32_0 = arith.constant 0 : i32
    return %arg0, %c0_i32 : i32, i32
  }
}

</mosaic_0001>

<llo_original>
// kernel: tpu_custom_call.1
$region0: #{tpu_custom_call.1}
  #allocation0 [shape = 'u32[]', space=smem, size = 0x4, offset = 0x4, fixed_abs, tag = 'smem constant byte address 0x4 - core index']
  #allocation1 [shape = 'u32[144,128]{1,0:T(1,128)}', space=vmem, size = 0x12000, scoped, tag = 'internal scratch']
  #allocation2 [shape = 's32[1]{0}', space=sflag, size = 0x4, scoped, tag = 'scoped memory for tpu_custom_call.1']
  #allocation3 [shape = 's32[1]{0:T(128)S(6)}', space=smem, size = 0x200, scoped, tag = 'prefetched SMEM operand 0']
  %s0 = inlined_call_operand.<no memory space> [shape: s32[1], index: 0, kind: input, shape index: {}]
  %s1 = inlined_call_operand.hbm [shape: f32[40,128], index: 1, kind: input, shape index: {}]
  %s2 = inlined_call_operand.hbm [shape: f32[48,128], index: 2, kind: input, shape index: {}]
  %s3 = inlined_call_operand.hbm [shape: f32[40,128], index: 3, kind: output, shape index: {}]
  %s4 = sld [smem:[#allocation0]]
  $region49: #{tpu_custom_call.1} parent=0
    _
  %s6 = ssub.s32 1, %s4
  %s7 = scalar_select 0, %s6, %s4
  %8 = sst [smem:[#allocation3]] %s0
  $region1: #{tpu_custom_call.1} parent=0
    #allocation4 [shape = 'u8[24576]{0}', space=vmem, size = 0x6000, scoped, tag = 'input window, operand 1']
    #allocation5 [shape = 's32[2]{0}', space=sflag, size = 0x8, scoped, tag = 'scoped memory for tpu_custom_call.1']
    #allocation6 [shape = 's32[2]{0}', space=sflag, size = 0x8, scoped, tag = 'scoped memory for tpu_custom_call.1']
    #allocation7 [shape = 'u8[24576]{0}', space=vmem, size = 0x6000, scoped, tag = 'input window, operand 2, single buffered']
    #allocation8 [shape = 's32[1]{0}', space=sflag, size = 0x4, scoped, tag = 'scoped memory for tpu_custom_call.1']
    #allocation9 [shape = 'u8[24576]{0}', space=vmem, size = 0x6000, scoped, tag = 'output window, operand 0']
    %9 = vsyncpa [#allocation5], 0
    %s10 = scalar_lea.sflag [#allocation5], 1
    %11 = vsyncpa %s10, 0
    %12 = vsyncpa [#allocation8], 0
    %13 = vsyncpa [#allocation6], 0
    %s14 = scalar_lea.sflag [#allocation6], 1
    %15 = vsyncpa %s14, 0
    loop: start=0, step=1, limit=4
    $region2: #{tpu_custom_call.1} parent=1 // loop_pre_header
      _
    $region3: #{tpu_custom_call.1} parent=1 // loop_header
      %s17 = sphi 0, %s21
      %p18 = scmp.ge.s32.totalorder %s17, 4
      %s27 = sphi 0, %s29
      %s30 = sphi 0, %s27
      %s31 = sphi 0, %s30
      %s47 = sphi 0, %s31
      %s51 = sphi 0, %s51
      %s53 = sphi 0, %s51
      %s54 = sphi 0, %s53
      %s68 = sphi 0, %s54
      %s74 = sphi 0, %s76
      %s77 = sphi 0, %s74
      %s78 = sphi 0, %s77
      %s94 = sphi 0, %s78
    $region4: #{tpu_custom_call.1} parent=1 // loop_header_branch
      %20 = sbr.rel (%p18) target = $region8
    $region5: #{tpu_custom_call.1} parent=1 // loop_body
      %s22 = ssub.s32 %s17, 1
      %s23 = ssub.s32 %s17, 2
      %s24 = sadd.s32 %s17, 1
      %s25 = ssub.s32 %s17, %s24
      %p26 = scmp.eq.s32.totalorder %s25, 0
      %s28 = sadd.s32 %s27, 1
      %s29 = scalar_select %p26, %s27, %s28
      %p32 = pneg %p26
      %p33 = scmp.eq.s32.totalorder %s17, 1
      %p34 = por %p32, %p33
      %p35 = scmp.ne.s32.totalorder %s27, %s30
      %p36 = scmp.eq.s32.totalorder %s17, 0
      %p37 = por %p35, %p36
      %p38 = scmp.ne.s32.totalorder %s27, %s30
      %p39 = scmp.eq.s32.totalorder %s22, 1
      %p40 = por %p38, %p39
      %p41 = scmp.ne.s32.totalorder %s30, %s31
      %p42 = scmp.eq.s32.totalorder %s22, 0
      %p43 = por %p41, %p42
      %p44 = scmp.ne.s32.totalorder %s30, %s31
      %p45 = scmp.eq.s32.totalorder %s23, 1
      %p46 = por %p44, %p45
      %p48 = scmp.ne.s32.totalorder %s31, %s47
      %p49 = scmp.eq.s32.totalorder %s23, 0
      %p50 = por %p48, %p49
      %s52 = sadd.s32 %s51, 1
      %p55 = scmp.eq.s32.totalorder %s17, 1
      %p56 = scmp.ne.s32.totalorder %s51, %s53
      %p57 = scmp.eq.s32.totalorder %s17, 0
      %p58 = por %p56, %p57
      %p59 = scmp.ne.s32.totalorder %s51, %s53
      %p60 = scmp.eq.s32.totalorder %s22, 1
      %p61 = por %p59, %p60
      %p62 = scmp.ne.s32.totalorder %s53, %s54
      %p63 = scmp.eq.s32.totalorder %s22, 0
      %p64 = por %p62, %p63
      %p65 = scmp.ne.s32.totalorder %s53, %s54
      %p66 = scmp.eq.s32.totalorder %s23, 1
      %p67 = por %p65, %p66
      %p69 = scmp.ne.s32.totalorder %s54, %s68
      %p70 = scmp.eq.s32.totalorder %s23, 0
      %p71 = por %p69, %p70
      %s72 = ssub.s32 %s17, %s24
      %p73 = scmp.eq.s32.totalorder %s72, 0
      %s75 = sadd.s32 %s74, 1
      %s76 = scalar_select %p73, %s74, %s75
      %p79 = pneg %p73
      %p80 = scmp.eq.s32.totalorder %s17, 1
      %p81 = por %p79, %p80
      %p82 = scmp.ne.s32.totalorder %s74, %s77
      %p83 = scmp.eq.s32.totalorder %s17, 0
      %p84 = por %p82, %p83
      %p85 = scmp.ne.s32.totalorder %s74, %s77
      %p86 = scmp.eq.s32.totalorder %s22, 1
      %p87 = por %p85, %p86
      %p88 = scmp.ne.s32.totalorder %s77, %s78
      %p89 = scmp.eq.s32.totalorder %s22, 0
      %p90 = por %p88, %p89
      %p91 = scmp.ne.s32.totalorder %s77, %s78
      %p92 = scmp.eq.s32.totalorder %s23, 1
      %p93 = por %p91, %p92
      %p95 = scmp.ne.s32.totalorder %s78, %s94
      %p96 = scmp.eq.s32.totalorder %s23, 0
      %p97 = por %p95, %p96
      %p98 = scmp.le.s32.totalorder 1, %s17
      %p99 = scmp.lt.s32.totalorder %s17, 3
      %p100 = pnand %p98, %p99
      %p101 = pneg %p100
      // Predicated region
      $region9: #{tpu_custom_call.1} parent=5 // pred_check
        _
      $region10: #{tpu_custom_call.1} parent=5 // pred_check_branch
        %103 = sbr.rel (%p100) target = $region12
      $region11: #{tpu_custom_call.1} parent=5 // pred_region
        %s104 = ssub.s32 %s17, 1
        // Predicated region
        $region13: #{tpu_custom_call.1} parent=11 // pred_check
          %p105 = pneg %p64
        $region14: #{tpu_custom_call.1} parent=11 // pred_check_branch
          %107 = sbr.rel (%p105) target = $region16
        $region15: #{tpu_custom_call.1} parent=11 // pred_region
          %s109 = ssub.s32 768, 768
          %110 = vsyncadd [#allocation8], %s109
          %s111 = sshll.u32 [#allocation7], 4
          %s112 = int_to_ptr.vmem [resolvable:$true] %s111
          %117 = dma.hbm_to_vmem [thread:$0]  %s2, 768, %s112, [#allocation8], 128, 128, 8
        $region16: #{tpu_custom_call.1} parent=11 // pred_fallthru
          _
      $region12: #{tpu_custom_call.1} parent=5 // pred_fallthru
        _
      %p118 = scmp.lt.s32.totalorder %s17, 2
      // Predicated region
      $region17: #{tpu_custom_call.1} parent=5 // pred_check
        %p119 = pneg %p118
      $region18: #{tpu_custom_call.1} parent=5 // pred_check_branch
        %121 = sbr.rel (%p119) target = $region20
      $region19: #{tpu_custom_call.1} parent=5 // pred_region
        // Predicated region
        $region21: #{tpu_custom_call.1} parent=19 // pred_check
          %p122 = pneg %p37
        $region22: #{tpu_custom_call.1} parent=19 // pred_check_branch
          %124 = sbr.rel (%p122) target = $region24
        $region23: #{tpu_custom_call.1} parent=19 // pred_region
          %s125 = sand.u32 %s27, 1
          %s126 = scalar_lea.sflag [#allocation5], %s125
          %s127 = sand.u32 %s27, 1
          %s128 = smul.addr %s127, 24
          %s129 = scalar_lea.vmem [#allocation4], %s128
          %s130 = smul.u32 3, %s17
          %s131 = ssub.s32 5, %s130
          %p132 = scmp.lt.s32.totalorder %s131, 3
          %s133 = scalar_select %p132, %s131, 3
          %s134 = smul.u32 128, %s133
          %s136 = ssub.s32 384, %s134
          %137 = vsyncadd %s126, %s136
          %p138 = scmp.ne.s32.totalorder 0, %s134
          %s139 = smul.addr %s130, 128
          %s140 = scalar_lea.hbm %s1, %s139
          %s141 = smul.u32 8, %s133
          %s142 = sshll.u32 %s129, 4
          %s143 = int_to_ptr.vmem [resolvable:$true] %s142
          %s144 = sshll.u32 %s141, 4
          %148 = dma.hbm_to_vmem [thread:$0]  (%p138), %s140, %s144, %s143, %s126, 128, 128, 8
        $region24: #{tpu_custom_call.1} parent=19 // pred_fallthru
          _
      $region20: #{tpu_custom_call.1} parent=5 // pred_fallthru
        _
      %p149 = scmp.le.s32.totalorder 1, %s17
      %p150 = scmp.lt.s32.totalorder %s17, 3
      %p151 = pnand %p149, %p150
      %p152 = pneg %p151
      // Predicated region
      $region25: #{tpu_custom_call.1} parent=5 // pred_check
        _
      $region26: #{tpu_custom_call.1} parent=5 // pred_check_branch
        %154 = sbr.rel (%p151) target = $region28
      $region27: #{tpu_custom_call.1} parent=5 // pred_region
        %s155 = ssub.s32 %s17, 1
        %s156 = sand.u32 %s30, 1
        %s157 = scalar_lea.sflag [#allocation5], %s156
        %s158 = sand.u32 %s30, 1
        %s159 = smul.addr %s158, 24
        %s160 = scalar_lea.vmem [#allocation4], %s159
        // Predicated region
        $region29: #{tpu_custom_call.1} parent=27 // pred_check
          %p161 = pneg %p43
        $region30: #{tpu_custom_call.1} parent=27 // pred_check_branch
          %163 = sbr.rel (%p161) target = $region32
        $region31: #{tpu_custom_call.1} parent=27 // pred_region
          %164 = dma.done %s157, 384
        $region32: #{tpu_custom_call.1} parent=27 // pred_fallthru
          _
        // Predicated region
        $region33: #{tpu_custom_call.1} parent=27 // pred_check
          %p165 = pneg %p64
        $region34: #{tpu_custom_call.1} parent=27 // pred_check_branch
          %167 = sbr.rel (%p165) target = $region36
        $region35: #{tpu_custom_call.1} parent=27 // pred_region
          %168 = dma.done [#allocation8], 768
        $region36: #{tpu_custom_call.1} parent=27 // pred_fallthru
          _
        %s169 = sand.u32 %s30, 1
        %s170 = scalar_lea.sflag [#allocation5], %s169
        %s171 = sand.u32 %s30, 1
        %s172 = smul.addr %s171, 24
        %s173 = scalar_lea.vmem [#allocation4], %s172
        %p174 = pneg %p43
        %p175 = pneg %p40
        %p176 = pneg %p64
        %p177 = pneg %p61
        %p178 = pneg %p90
        %p179 = pneg %p87
        %s180 = sand.u32 %s77, 1
        %s181 = scalar_lea.sflag [#allocation6], %s180
        %s182 = sand.u32 %s77, 1
        %s183 = smul.addr %s182, 24
        %s184 = scalar_lea.vmem [#allocation9], %s183
        %s185 = smul.u32 3, %s22
        %s186 = ssub.s32 5, %s185
        %p187 = scmp.lt.s32.totalorder %s186, 3
        %s188 = scalar_select %p187, %s186, 3
        %s189 = smul.u32 128, %s188
        %s190 = smul.u32 3, %s22
        %s191 = ssub.s32 5, %s190
        %p192 = scmp.lt.s32.totalorder %s191, 3
        %s193 = scalar_select %p192, %s191, 3
        %s194 = smul.u32 128, %s193
        %s195 = smul.u32 %s22, 24
        %s196 = scalar_lea.vmem [#allocation7], %s195
        %v197 = vld [vmem:[%s196] sm:$0xff]
        %v198 = vld [vmem:[%s196 + $0x8] sm:$0xff]
        %v199 = vld [vmem:[%s196 + $0x10] sm:$0xff]
        %v200 = vld [vmem:[%s160] sm:$0xff]
        %v201 = vld [vmem:[%s160 + $0x8] sm:$0xff]
        %v202 = vld [vmem:[%s160 + $0x10] sm:$0xff]
        %v203 = vadd.f32 %v200, %v197
        %v204 = vadd.f32 %v201, %v198
        %v205 = vadd.f32 %v202, %v199
        %206 = vst [vmem:[%s184] sm:$0xff] %v203
        %207 = vst [vmem:[%s184 + $0x8] sm:$0xff] %v204
        %208 = vst [vmem:[%s184 + $0x10] sm:$0xff] %v205
        %s209 = sand.u32 %s77, 1
        %s210 = scalar_lea.sflag [#allocation6], %s209
        %s211 = sand.u32 %s77, 1
        %s212 = smul.addr %s211, 24
        %s213 = scalar_lea.vmem [#allocation9], %s212
        // Predicated region
        $region37: #{tpu_custom_call.1} parent=27 // pred_check
          %p214 = pneg %p87
        $region38: #{tpu_custom_call.1} parent=27 // pred_check_branch
          %216 = sbr.rel (%p214) target = $region40
        $region39: #{tpu_custom_call.1} parent=27 // pred_region
          %s217 = smul.u32 3, %s22
          %s218 = ssub.s32 5, %s217
          %p219 = scmp.lt.s32.totalorder %s218, 3
          %s220 = scalar_select %p219, %s218, 3
          %s221 = smul.u32 128, %s220
          %s223 = ssub.s32 384, %s221
          %224 = vsyncadd %s210, %s223
          %p225 = scmp.ne.s32.totalorder 0, %s221
          %s226 = smul.addr %s217, 128
          %s227 = scalar_lea.hbm %s3, %s226
          %s228 = smul.u32 8, %s220
          %s229 = sshll.u32 %s213, 4
          %s230 = int_to_ptr.vmem [resolvable:$true] %s229
          %s231 = sshll.u32 %s228, 4
          %235 = dma.vmem_to_hbm [thread:$0]  (%p225), %s230, %s231, %s227, %s210, 128, 128, 8
        $region40: #{tpu_custom_call.1} parent=27 // pred_fallthru
          _
      $region28: #{tpu_custom_call.1} parent=5 // pred_fallthru
        _
      %p236 = scmp.le.s32.totalorder 2, %s17
      // Predicated region
      $region41: #{tpu_custom_call.1} parent=5 // pred_check
        %p237 = pneg %p236
      $region42: #{tpu_custom_call.1} parent=5 // pred_check_branch
        %239 = sbr.rel (%p237) target = $region44
      $region43: #{tpu_custom_call.1} parent=5 // pred_region
        %s240 = ssub.s32 %s17, 2
        // Predicated region
        $region45: #{tpu_custom_call.1} parent=43 // pred_check
          %p241 = pneg %p93
        $region46: #{tpu_custom_call.1} parent=43 // pred_check_branch
          %243 = sbr.rel (%p241) target = $region48
        $region47: #{tpu_custom_call.1} parent=43 // pred_region
          %s244 = sand.u32 %s78, 1
          %s245 = scalar_lea.sflag [#allocation6], %s244
          %s246 = sand.u32 %s78, 1
          %s247 = smul.addr %s246, 24
          %s248 = scalar_lea.vmem [#allocation9], %s247
          %249 = dma.done %s245, 384
        $region48: #{tpu_custom_call.1} parent=43 // pred_fallthru
          _
      $region44: #{tpu_custom_call.1} parent=5 // pred_fallthru
        _
    $region6: #{tpu_custom_call.1} parent=1 // loop_footer
      %s21 = sadd.s32 1, %s17
    $region7: #{tpu_custom_call.1} parent=1 // loop_footer_branch
      %16 = sbr.rel target = $region3
    $region8: #{tpu_custom_call.1} parent=1 // loop_exit
      _
    %250 = vsyncpa [#allocation5], 1
    %s251 = scalar_lea.sflag [#allocation5], 1
    %252 = vsyncpa %s251, 1
    %253 = vsyncpa [#allocation8], 1
    %254 = vsyncpa [#allocation6], 1
    %s255 = scalar_lea.sflag [#allocation6], 1
    %256 = vsyncpa %s255, 1

</llo_original>
